<compile_context>
chip_gen: v7x
topology: tpu7x:2x2x1
jax: 0.10.0
libtpu: 0.0.40
codegen_flags: <defaults>
</compile_context>

<pallas_src>
import functools

import jax
import jax.numpy as jnp
from jax.experimental import pallas as pl
from jax.experimental.pallas import tpu as pltpu


def _round_up(x, m):
    return ((x + m - 1) // m) * m


def _vmem_bytes(shape, dtype):
    """Rough VMEM footprint of a block, padding the trailing dims to (8, 128)."""
    shape = list(shape)
    if len(shape) >= 1:
        shape[-1] = _round_up(shape[-1], 128)
    if len(shape) >= 2:
        shape[-2] = _round_up(shape[-2], 8)
    n = 1
    for s in shape:
        n *= s
    return n * jnp.dtype(dtype).itemsize


def _make_kernel(Nb, C_in, C_out, K, dilation, T_tile, halo, cdt, multi_tile):
    def kernel(x_ref, m_ref, wd_ref, bd_ref, w1_ref, b1_ref, out_ref, win_ref):
        # x_ref:   (Nb, C_in, T_tile)      input tiles (T on lanes)
        # m_ref:   (Nb, 1, T_tile)         mask rows, lane-dense
        # wd_ref:  (K, C_out, C_in)        dilated-conv weights, per-tap matrices
        # bd_ref:  (C_out, 1)              dilated-conv bias
        # w1_ref:  (C_out, C_out)          1x1-conv weights
        # b1_ref:  (C_out, 1)              1x1-conv bias
        # out_ref: (Nb, C_out, T_tile)
        # win_ref: (Nb, C_in, halo+T_tile) persistent window: [carried halo | x tile]
        j = pl.program_id(1)

        if halo > 0:
            @pl.when(j == 0)
            def _init():
                # New sequence (new batch block): zero the causal left padding.
                for b in range(Nb):
                    win_ref[b, :, :halo] = jnp.zeros((C_in, halo), win_ref.dtype)

        bd_f = bd_ref[...].astype(jnp.float32)
        b1_f = b1_ref[...].astype(jnp.float32)
        w1_m = w1_ref[...]

        for b in range(Nb):
            xb = x_ref[b]                                  # (C_in, T_tile)
            if halo > 0:
                # Single pass over x: place the tile after the carried halo.
                win_ref[b, :, halo:] = xb

            # Dilated causal conv: K accumulating MXU dots straight off the
            # window views (no taps scratch / gather through the vst slot).
            acc = jnp.dot(wd_ref[K - 1], xb, preferred_element_type=jnp.float32)
            for k in range(K - 1):
                acc += jnp.dot(
                    wd_ref[k],
                    win_ref[b, :, k * dilation:k * dilation + T_tile],
                    preferred_element_type=jnp.float32)

            h = jnp.maximum(acc + bd_f, 0.0)               # bias + ReLU (f32)
            out = jnp.dot(w1_m, h.astype(cdt),
                          preferred_element_type=jnp.float32) + b1_f

            # dropout == identity (inference); fused residual + mask, f32 epilogue.
            res = (xb.astype(jnp.float32) + out) * m_ref[b].astype(jnp.float32)
            out_ref[b] = res.astype(out_ref.dtype)

            if halo > 0 and multi_tile:
                # Carry the last `halo` input columns to the next T-tile.
                win_ref[b, :, :halo] = win_ref[b, :, T_tile:T_tile + halo]

    return kernel


def dilated_residual_causal_layer(x, mask, wd, bd, w1, b1, *,
                                  dilation, kernel_size,
                                  t_tile=None, n_block=None,
                                  compute_dtype=None, input_buffering=3):
    """x: (N, C_in, T), mask: (N, C, T). Returns (N, C_out, T) in compute dtype."""
    N, C_in, T = x.shape
    C_out, wd_cin, K = wd.shape
    if K != kernel_size or wd_cin != C_in:
        raise ValueError("conv_dilated weight shape mismatch with x/kernel_size")
    if C_out != C_in:
        raise ValueError(
            "the residual add (x + out) requires in_channels == out_channels; "
            f"got in={C_in}, out={C_out}")
    padding = 2 * int(dilation + dilation * (kernel_size - 3) / 2)
    # The residual add only shape-checks when the causal conv output length
    # equals T, i.e. padding == (K-1)*dilation.
    if padding != dilation * (K - 1):
        raise ValueError(
            "padding formula does not give a length-preserving causal conv "
            f"(padding={padding}, (K-1)*dilation={dilation * (K - 1)})")
    halo = padding
    cdt = jnp.dtype(compute_dtype) if compute_dtype is not None else x.dtype
    itemsize = jnp.dtype(cdt).itemsize

    # ---- generation-aware VMEM budget (v7x: 64 MiB/TC; v5e/v6e: 128 MiB) ----
    try:
        vmem_cap = int(getattr(pltpu.get_tpu_info(), "vmem_capacity_bytes",
                               64 * 2**20))
    except Exception:
        vmem_cap = 64 * 2**20
    vmem_budget = 48 * 2**20 if vmem_cap <= 64 * 2**20 else 100 * 2**20

    T_128 = _round_up(T, 128)

    # ---- batch blocking for small channel counts ----
    if n_block is None:
        if max(C_in, C_out) <= 32:
            nb = min(N, 8)
        elif max(C_in, C_out) <= 128:
            nb = min(N, 2)
        else:
            nb = 1
    else:
        nb = max(1, min(N, int(n_block)))

    bc = 3 if (input_buffering is not None and input_buffering >= 3) else 2

    def est_bytes(nb_, tt_):
        return (bc * _vmem_bytes((nb_, C_in, tt_), cdt)
                + bc * _vmem_bytes((nb_, 1, tt_), cdt)
                + 2 * _vmem_bytes((nb_, C_out, tt_), cdt)
                + 2 * (_vmem_bytes((K, C_out, C_in), cdt)
                       + _vmem_bytes((C_out, C_out), cdt)
                       + 2 * _vmem_bytes((C_out, 1), cdt))
                + _vmem_bytes((nb_, C_in, tt_ + halo), cdt))

    while nb > 1 and est_bytes(nb, 128) > vmem_budget:
        nb = max(1, nb // 2)

    # ---- T tiling (lane axis): as wide as the VMEM budget allows ----
    if t_tile is None:
        tt = min(4096, T_128)
        while tt > 128 and est_bytes(nb, tt) > vmem_budget:
            tt = _round_up(max(128, tt // 2), 128)
    else:
        tt = max(128, _round_up(int(t_tile), 128))

    if T_128 <= tt:
        T_tile = T_pad = T_128
        nT = 1
    else:
        T_tile = max(tt, _round_up(halo, 128))
        if T_tile < halo:
            raise NotImplementedError(
                "T tile shorter than the causal receptive field is unsupported")
        T_pad = _round_up(T, T_tile)
        nT = T_pad // T_tile
    multi_tile = nT > 1

    N_pad = _round_up(N, nb)
    nG = N_pad // nb

    # ---- wrapper glue: dtype casts, padding, weight re-layout ----
    xc = x.astype(cdt)
    mrow = mask[:, 0:1, :].astype(cdt)                      # (N, 1, T) lane-dense
    pad_n, pad_t = N_pad - N, T_pad - T
    if pad_n or pad_t:
        xc = jnp.pad(xc, ((0, pad_n), (0, 0), (0, pad_t)))
        mrow = jnp.pad(mrow, ((0, pad_n), (0, 0), (0, pad_t)))
    wd_taps = jnp.transpose(wd, (2, 0, 1)).astype(cdt)      # (K, C_out, C_in)
    w1_m = w1[:, :, 0].astype(cdt)                          # (C_out, C_out)
    bd_c = bd.reshape(C_out, 1).astype(cdt)
    b1_c = b1.reshape(C_out, 1).astype(cdt)

    kernel = _make_kernel(nb, C_in, C_out, K, dilation, T_tile, halo, cdt,
                          multi_tile)

    est = est_bytes(nb, T_tile)
    vmem_limit = int(min(vmem_budget, max(32 * 2**20, int(1.5 * est) + (2 << 20))))
    vmem_limit = int(max(vmem_limit, est + (1 << 20)))

    cost = pl.CostEstimate(
        flops=int(N_pad) * int(T_pad) * int(C_out) * (2 * K * C_in + 2 * C_out + 5),
        transcendentals=0,
        bytes_accessed=int(
            (N_pad * C_in * T_pad + N_pad * T_pad + N_pad * C_out * T_pad) * itemsize
            + (K * C_out * C_in + C_out * C_out + 2 * C_out) * itemsize))

    win_shape = (nb, C_in, halo + T_tile) if halo > 0 else (8, 128)

    def build_and_run(deep):
        if deep:
            pm = pl.Buffered(input_buffering)
            x_spec = pl.BlockSpec((nb, C_in, T_tile), lambda n, j: (n, 0, j),
                                  pipeline_mode=pm)
            m_spec = pl.BlockSpec((nb, 1, T_tile), lambda n, j: (n, 0, j),
                                  pipeline_mode=pm)
        else:
            x_spec = pl.BlockSpec((nb, C_in, T_tile), lambda n, j: (n, 0, j))
            m_spec = pl.BlockSpec((nb, 1, T_tile), lambda n, j: (n, 0, j))
        call = pl.pallas_call(
            kernel,
            out_shape=jax.ShapeDtypeStruct((N_pad, C_out, T_pad), cdt),
            grid_spec=pltpu.PrefetchScalarGridSpec(
                num_scalar_prefetch=0,
                grid=(nG, nT),
                in_specs=[
                    x_spec,
                    m_spec,
                    pl.BlockSpec((K, C_out, C_in), lambda n, j: (0, 0, 0)),
                    pl.BlockSpec((C_out, 1), lambda n, j: (0, 0)),
                    pl.BlockSpec((C_out, C_out), lambda n, j: (0, 0)),
                    pl.BlockSpec((C_out, 1), lambda n, j: (0, 0)),
                ],
                out_specs=pl.BlockSpec((nb, C_out, T_tile), lambda n, j: (n, 0, j)),
                scratch_shapes=[pltpu.VMEM(win_shape, cdt)],   # carried causal window
            ),
            compiler_params=pltpu.CompilerParams(
                dimension_semantics=("parallel", "arbitrary"),
                vmem_limit_bytes=vmem_limit),
            cost_estimate=cost,
        )
        return jax.block_until_ready(call(xc, mrow, wd_taps, bd_c, w1_m, b1_c))

    deep = bool(input_buffering) and input_buffering >= 3 and (nG * nT) >= 3
    try:
        out = build_and_run(deep)
    except Exception:
        if not deep:
            raise
        out = build_and_run(False)          # fall back to default pipeline depth

    return out[:N, :, :T]                   # (N, C_out, T), NCW


def _reference(x, mask, wd, bd, w1, b1, *, dilation, kernel_size):
    padding = 2 * int(dilation + dilation * (kernel_size - 3) / 2)
    xp = jnp.pad(x, ((0, 0), (0, 0), (padding, 0)))
    out = jax.lax.conv_general_dilated(
        xp, wd, window_strides=(1,), padding="VALID",
        rhs_dilation=(dilation,), dimension_numbers=("NCH", "OIH", "NCH"))
    out = out + bd[None, :, None]
    out = jax.nn.relu(out)
    out = jax.lax.conv_general_dilated(
        out, w1, window_strides=(1,), padding="VALID",
        dimension_numbers=("NCH", "OIH", "NCH"))
    out = out + b1[None, :, None]
    return (x + out) * mask[:, 0:1, :]


if __name__ == "__main__":
    # Small, module-consistent shapes.
    N, C, T = 2, 8, 16
    kernel_size, dilation = 3, 2

    key = jax.random.PRNGKey(0)
    k1, k2, k3, k4, k5, k6, k7 = jax.random.split(key, 7)

    x = jax.random.normal(k1, (N, C, T), dtype=jnp.float32)
    mask = (jax.random.uniform(k2, (N, C, T)) > 0.3).astype(jnp.float32)

    # Deterministic parameter init (Conv1d shapes from __init__).
    wd = 0.1 * jax.random.normal(k3, (C, C, kernel_size), dtype=jnp.float32)
    bd = 0.1 * jax.random.normal(k4, (C,), dtype=jnp.float32)
    w1 = 0.1 * jax.random.normal(k5, (C, C, 1), dtype=jnp.float32)
    b1 = 0.1 * jax.random.normal(k6, (C,), dtype=jnp.float32)

    run = functools.partial(dilated_residual_causal_layer,
                            dilation=dilation, kernel_size=kernel_size)

    # 1) f32, single (lane-padded) T-tile, batch-blocked grid.
    out = run(x, mask, wd, bd, w1, b1)
    ref = _reference(x, mask, wd, bd, w1, b1,
                     dilation=dilation, kernel_size=kernel_size)
    assert out.shape == (N, C, T)
    assert jnp.allclose(out, ref, atol=1e-5, rtol=1e-5), "f32 mismatch vs reference"

    # 2) f32, multiple T-tiles (exercises the carried causal halo across tiles
    #    and the deeper input buffering path).
    T2 = 384
    x2 = jax.random.normal(k7, (N, C, T2), dtype=jnp.float32)
    mask2 = (jax.random.uniform(k2, (N, C, T2)) > 0.3).astype(jnp.float32)
    out2 = run(x2, mask2, wd, bd, w1, b1, t_tile=128)
    ref2 = _reference(x2, mask2, wd, bd, w1, b1,
                      dilation=dilation, kernel_size=kernel_size)
    assert out2.shape == (N, C, T2)
    assert jnp.allclose(out2, ref2, atol=1e-5, rtol=1e-5), "tiled mismatch vs reference"

    # 3) bf16 DMA/MXU operands with f32 accumulation (looser tolerance).
    out_bf16 = run(x, mask, wd, bd, w1, b1, compute_dtype=jnp.bfloat16)
    assert out_bf16.dtype == jnp.bfloat16
    assert jnp.allclose(out_bf16.astype(jnp.float32), ref, atol=5e-2, rtol=5e-2), \
        "bf16 mismatch vs reference"

    print("KERNEL_OK")
</pallas_src>

<mosaic_0001>
module attributes {stable_mosaic.version = 11 : i64} {
  func.func @kernel(%arg0: i32, %arg1: i32, %arg2: memref<2x8x128xf32, #tpu.memory_space<vmem>>, %arg3: memref<2x1x128xf32, #tpu.memory_space<vmem>>, %arg4: memref<3x8x8xf32, #tpu.memory_space<vmem>>, %arg5: memref<8x1xf32, #tpu.memory_space<vmem>>, %arg6: memref<8x8xf32, #tpu.memory_space<vmem>>, %arg7: memref<8x1xf32, #tpu.memory_space<vmem>>, %arg8: memref<2x8x128xf32, #tpu.memory_space<vmem>>, %arg9: memref<2x8x132xf32, #tpu.memory_space<vmem>>) attributes {dimension_semantics = [#tpu.dimension_semantics<parallel>, #tpu.dimension_semantics<arbitrary>], iteration_bounds = array<i64: 1, 1>, scalar_prefetch = 0 : i64, scratch_operands = 1 : i64, tpu.core_type = #tpu.core_type<tc>, window_params = [{transform_indices = @transform_0, window_bounds = array<i64: 2, 8, 128>}, {transform_indices = @transform_1, window_bounds = array<i64: 2, 1, 128>}, {pipeline_mode = #tpu.pipeline_mode<synchronous>, transform_indices = @transform_2, window_bounds = array<i64: 3, 8, 8>}, {pipeline_mode = #tpu.pipeline_mode<synchronous>, transform_indices = @transform_3, window_bounds = array<i64: 8, 1>}, {pipeline_mode = #tpu.pipeline_mode<synchronous>, transform_indices = @transform_4, window_bounds = array<i64: 8, 8>}, {pipeline_mode = #tpu.pipeline_mode<synchronous>, transform_indices = @transform_5, window_bounds = array<i64: 8, 1>}, {transform_indices = @transform_6, window_bounds = array<i64: 2, 8, 128>}]} {
    %c0_i32 = arith.constant 0 : i32
    %0 = arith.cmpi eq, %arg1, %c0_i32 : i32
    %1 = arith.extui %0 : i1 to i32
    %c0_i32_0 = arith.constant 0 : i32
    %2 = arith.cmpi ne, %1, %c0_i32_0 : i32
    scf.if %2 {
      %cst_66 = arith.constant 0.000000e+00 : f32
      %76 = vector.broadcast %cst_66 : f32 to vector<8x4xf32>
      %c0_67 = arith.constant 0 : index
      %c0_68 = arith.constant 0 : index
      %c0_69 = arith.constant 0 : index
      %77 = vector.load %arg9[%c0_67, %c0_68, %c0_69] : memref<2x8x132xf32, #tpu.memory_space<vmem>>, vector<1x8x4xf32>
      %78 = vector.shape_cast %77 : vector<1x8x4xf32> to vector<8x4xf32>
      %79 = vector.shape_cast %76 : vector<8x4xf32> to vector<1x8x4xf32>
      tpu.vector_store %arg9[%c0_67, %c0_68, %c0_69], %79 {strides = array<i32>} : memref<2x8x132xf32, #tpu.memory_space<vmem>>, vector<1x8x4xf32>,
      %cst_70 = arith.constant 0.000000e+00 : f32
      %80 = vector.broadcast %cst_70 : f32 to vector<8x4xf32>
      %c1_71 = arith.constant 1 : index
      %c0_72 = arith.constant 0 : index
      %c0_73 = arith.constant 0 : index
      %81 = vector.load %arg9[%c1_71, %c0_72, %c0_73] : memref<2x8x132xf32, #tpu.memory_space<vmem>>, vector<1x8x4xf32>
      %82 = vector.shape_cast %81 : vector<1x8x4xf32> to vector<8x4xf32>
      %83 = vector.shape_cast %80 : vector<8x4xf32> to vector<1x8x4xf32>
      tpu.vector_store %arg9[%c1_71, %c0_72, %c0_73], %83 {strides = array<i32>} : memref<2x8x132xf32, #tpu.memory_space<vmem>>, vector<1x8x4xf32>,
    } else {
    }
    %c0 = arith.constant 0 : index
    %c0_1 = arith.constant 0 : index
    %3 = vector.load %arg5[%c0, %c0_1] : memref<8x1xf32, #tpu.memory_space<vmem>>, vector<8x1xf32>
    %c0_2 = arith.constant 0 : index
    %c0_3 = arith.constant 0 : index
    %4 = vector.load %arg7[%c0_2, %c0_3] : memref<8x1xf32, #tpu.memory_space<vmem>>, vector<8x1xf32>
    %c0_4 = arith.constant 0 : index
    %c0_5 = arith.constant 0 : index
    %5 = vector.load %arg6[%c0_4, %c0_5] : memref<8x8xf32, #tpu.memory_space<vmem>>, vector<8x8xf32>
    %c0_6 = arith.constant 0 : index
    %c0_7 = arith.constant 0 : index
    %c0_8 = arith.constant 0 : index
    %6 = vector.load %arg2[%c0_6, %c0_7, %c0_8] : memref<2x8x128xf32, #tpu.memory_space<vmem>>, vector<1x8x128xf32>
    %7 = vector.shape_cast %6 : vector<1x8x128xf32> to vector<8x128xf32>
    %c0_9 = arith.constant 0 : index
    %c0_10 = arith.constant 0 : index
    %c4 = arith.constant 4 : index
    %8 = vector.load %arg9[%c0_9, %c0_10, %c4] : memref<2x8x132xf32, #tpu.memory_space<vmem>>, vector<1x8x128xf32>
    %9 = vector.shape_cast %8 : vector<1x8x128xf32> to vector<8x128xf32>
    %10 = vector.shape_cast %7 : vector<8x128xf32> to vector<1x8x128xf32>
    tpu.vector_store %arg9[%c0_9, %c0_10, %c4], %10 {strides = array<i32>} : memref<2x8x132xf32, #tpu.memory_space<vmem>>, vector<1x8x128xf32>,
    %c2 = arith.constant 2 : index
    %c0_11 = arith.constant 0 : index
    %c0_12 = arith.constant 0 : index
    %11 = vector.load %arg4[%c2, %c0_11, %c0_12] : memref<3x8x8xf32, #tpu.memory_space<vmem>>, vector<1x8x8xf32>
    %12 = vector.shape_cast %11 : vector<1x8x8xf32> to vector<8x8xf32>
    %cst = arith.constant dense<0.000000e+00> : vector<8x128xf32>
    %13 = tpu.matmul %12, %7, %cst {dimension_numbers = #tpu.dot_dimension_numbers<[1], [0], [0], [1], [0, 0, 1, 1], [], []>} : vector<8x8xf32>, vector<8x128xf32>, vector<8x128xf32> -> vector<8x128xf32>
    %c0_13 = arith.constant 0 : index
    %c0_14 = arith.constant 0 : index
    %c0_15 = arith.constant 0 : index
    %14 = vector.load %arg4[%c0_13, %c0_14, %c0_15] : memref<3x8x8xf32, #tpu.memory_space<vmem>>, vector<1x8x8xf32>
    %15 = vector.shape_cast %14 : vector<1x8x8xf32> to vector<8x8xf32>
    %c0_16 = arith.constant 0 : index
    %c0_17 = arith.constant 0 : index
    %c0_18 = arith.constant 0 : index
    %16 = vector.load %arg9[%c0_16, %c0_17, %c0_18] : memref<2x8x132xf32, #tpu.memory_space<vmem>>, vector<1x8x128xf32>
    %17 = vector.shape_cast %16 : vector<1x8x128xf32> to vector<8x128xf32>
    %cst_19 = arith.constant dense<0.000000e+00> : vector<8x128xf32>
    %18 = tpu.matmul %15, %17, %cst_19 {dimension_numbers = #tpu.dot_dimension_numbers<[1], [0], [0], [1], [0, 0, 1, 1], [], []>} : vector<8x8xf32>, vector<8x128xf32>, vector<8x128xf32> -> vector<8x128xf32>
    %19 = arith.addf %13, %18 : vector<8x128xf32>
    %c1 = arith.constant 1 : index
    %c0_20 = arith.constant 0 : index
    %c0_21 = arith.constant 0 : index
    %20 = vector.load %arg4[%c1, %c0_20, %c0_21] : memref<3x8x8xf32, #tpu.memory_space<vmem>>, vector<1x8x8xf32>
    %21 = vector.shape_cast %20 : vector<1x8x8xf32> to vector<8x8xf32>
    %c0_22 = arith.constant 0 : index
    %c0_23 = arith.constant 0 : index
    %c2_24 = arith.constant 2 : index
    %22 = vector.load %arg9[%c0_22, %c0_23, %c2_24] : memref<2x8x132xf32, #tpu.memory_space<vmem>>, vector<1x8x128xf32>
    %23 = vector.shape_cast %22 : vector<1x8x128xf32> to vector<8x128xf32>
    %cst_25 = arith.constant dense<0.000000e+00> : vector<8x128xf32>
    %24 = tpu.matmul %21, %23, %cst_25 {dimension_numbers = #tpu.dot_dimension_numbers<[1], [0], [0], [1], [0, 0, 1, 1], [], []>} : vector<8x8xf32>, vector<8x128xf32>, vector<8x128xf32> -> vector<8x128xf32>
    %25 = arith.addf %19, %24 : vector<8x128xf32>
    %26 = vector.broadcast %3 : vector<8x1xf32> to vector<8x128xf32>
    %27 = arith.addf %25, %26 : vector<8x128xf32>
    %cst_26 = arith.constant 0.000000e+00 : f32
    %28 = vector.broadcast %cst_26 : f32 to vector<8x128xf32>
    %29 = arith.maximumf %27, %28 : vector<8x128xf32>
    %cst_27 = arith.constant dense<0.000000e+00> : vector<8x128xf32>
    %30 = tpu.matmul %5, %29, %cst_27 {dimension_numbers = #tpu.dot_dimension_numbers<[1], [0], [0], [1], [0, 0, 1, 1], [], []>} : vector<8x8xf32>, vector<8x128xf32>, vector<8x128xf32> -> vector<8x128xf32>
    %31 = vector.broadcast %4 : vector<8x1xf32> to vector<8x128xf32>
    %32 = arith.addf %30, %31 : vector<8x128xf32>
    %33 = arith.addf %7, %32 : vector<8x128xf32>
    %c0_28 = arith.constant 0 : index
    %c0_29 = arith.constant 0 : index
    %c0_30 = arith.constant 0 : index
    %34 = vector.load %arg3[%c0_28, %c0_29, %c0_30] : memref<2x1x128xf32, #tpu.memory_space<vmem>>, vector<1x1x128xf32>
    %35 = vector.shape_cast %34 : vector<1x1x128xf32> to vector<1x128xf32>
    %36 = vector.broadcast %35 : vector<1x128xf32> to vector<8x128xf32>
    %37 = arith.mulf %33, %36 : vector<8x128xf32>
    %c0_31 = arith.constant 0 : index
    %c0_32 = arith.constant 0 : index
    %c0_33 = arith.constant 0 : index
    %38 = vector.load %arg8[%c0_31, %c0_32, %c0_33] : memref<2x8x128xf32, #tpu.memory_space<vmem>>, vector<1x8x128xf32>
    %39 = vector.shape_cast %38 : vector<1x8x128xf32> to vector<8x128xf32>
    %40 = vector.shape_cast %37 : vector<8x128xf32> to vector<1x8x128xf32>
    tpu.vector_store %arg8[%c0_31, %c0_32, %c0_33], %40 {strides = array<i32>} : memref<2x8x128xf32, #tpu.memory_space<vmem>>, vector<1x8x128xf32>,
    %c1_34 = arith.constant 1 : index
    %c0_35 = arith.constant 0 : index
    %c0_36 = arith.constant 0 : index
    %41 = vector.load %arg2[%c1_34, %c0_35, %c0_36] : memref<2x8x128xf32, #tpu.memory_space<vmem>>, vector<1x8x128xf32>
    %42 = vector.shape_cast %41 : vector<1x8x128xf32> to vector<8x128xf32>
    %c1_37 = arith.constant 1 : index
    %c0_38 = arith.constant 0 : index
    %c4_39 = arith.constant 4 : index
    %43 = vector.load %arg9[%c1_37, %c0_38, %c4_39] : memref<2x8x132xf32, #tpu.memory_space<vmem>>, vector<1x8x128xf32>
    %44 = vector.shape_cast %43 : vector<1x8x128xf32> to vector<8x128xf32>
    %45 = vector.shape_cast %42 : vector<8x128xf32> to vector<1x8x128xf32>
    tpu.vector_store %arg9[%c1_37, %c0_38, %c4_39], %45 {strides = array<i32>} : memref<2x8x132xf32, #tpu.memory_space<vmem>>, vector<1x8x128xf32>,
    %c2_40 = arith.constant 2 : index
    %c0_41 = arith.constant 0 : index
    %c0_42 = arith.constant 0 : index
    %46 = vector.load %arg4[%c2_40, %c0_41, %c0_42] : memref<3x8x8xf32, #tpu.memory_space<vmem>>, vector<1x8x8xf32>
    %47 = vector.shape_cast %46 : vector<1x8x8xf32> to vector<8x8xf32>
    %cst_43 = arith.constant dense<0.000000e+00> : vector<8x128xf32>
    %48 = tpu.matmul %47, %42, %cst_43 {dimension_numbers = #tpu.dot_dimension_numbers<[1], [0], [0], [1], [0, 0, 1, 1], [], []>} : vector<8x8xf32>, vector<8x128xf32>, vector<8x128xf32> -> vector<8x128xf32>
    %c0_44 = arith.constant 0 : index
    %c0_45 = arith.constant 0 : index
    %c0_46 = arith.constant 0 : index
    %49 = vector.load %arg4[%c0_44, %c0_45, %c0_46] : memref<3x8x8xf32, #tpu.memory_space<vmem>>, vector<1x8x8xf32>
    %50 = vector.shape_cast %49 : vector<1x8x8xf32> to vector<8x8xf32>
    %c1_47 = arith.constant 1 : index
    %c0_48 = arith.constant 0 : index
    %c0_49 = arith.constant 0 : index
    %51 = vector.load %arg9[%c1_47, %c0_48, %c0_49] : memref<2x8x132xf32, #tpu.memory_space<vmem>>, vector<1x8x128xf32>
    %52 = vector.shape_cast %51 : vector<1x8x128xf32> to vector<8x128xf32>
    %cst_50 = arith.constant dense<0.000000e+00> : vector<8x128xf32>
    %53 = tpu.matmul %50, %52, %cst_50 {dimension_numbers = #tpu.dot_dimension_numbers<[1], [0], [0], [1], [0, 0, 1, 1], [], []>} : vector<8x8xf32>, vector<8x128xf32>, vector<8x128xf32> -> vector<8x128xf32>
    %54 = arith.addf %48, %53 : vector<8x128xf32>
    %c1_51 = arith.constant 1 : index
    %c0_52 = arith.constant 0 : index
    %c0_53 = arith.constant 0 : index
    %55 = vector.load %arg4[%c1_51, %c0_52, %c0_53] : memref<3x8x8xf32, #tpu.memory_space<vmem>>, vector<1x8x8xf32>
    %56 = vector.shape_cast %55 : vector<1x8x8xf32> to vector<8x8xf32>
    %c1_54 = arith.constant 1 : index
    %c0_55 = arith.constant 0 : index
    %c2_56 = arith.constant 2 : index
    %57 = vector.load %arg9[%c1_54, %c0_55, %c2_56] : memref<2x8x132xf32, #tpu.memory_space<vmem>>, vector<1x8x128xf32>
    %58 = vector.shape_cast %57 : vector<1x8x128xf32> to vector<8x128xf32>
    %cst_57 = arith.constant dense<0.000000e+00> : vector<8x128xf32>
    %59 = tpu.matmul %56, %58, %cst_57 {dimension_numbers = #tpu.dot_dimension_numbers<[1], [0], [0], [1], [0, 0, 1, 1], [], []>} : vector<8x8xf32>, vector<8x128xf32>, vector<8x128xf32> -> vector<8x128xf32>
    %60 = arith.addf %54, %59 : vector<8x128xf32>
    %61 = vector.broadcast %3 : vector<8x1xf32> to vector<8x128xf32>
    %62 = arith.addf %60, %61 : vector<8x128xf32>
    %cst_58 = arith.constant 0.000000e+00 : f32
    %63 = vector.broadcast %cst_58 : f32 to vector<8x128xf32>
    %64 = arith.maximumf %62, %63 : vector<8x128xf32>
    %cst_59 = arith.constant dense<0.000000e+00> : vector<8x128xf32>
    %65 = tpu.matmul %5, %64, %cst_59 {dimension_numbers = #tpu.dot_dimension_numbers<[1], [0], [0], [1], [0, 0, 1, 1], [], []>} : vector<8x8xf32>, vector<8x128xf32>, vector<8x128xf32> -> vector<8x128xf32>
    %66 = vector.broadcast %4 : vector<8x1xf32> to vector<8x128xf32>
    %67 = arith.addf %65, %66 : vector<8x128xf32>
    %68 = arith.addf %42, %67 : vector<8x128xf32>
    %c1_60 = arith.constant 1 : index
    %c0_61 = arith.constant 0 : index
    %c0_62 = arith.constant 0 : index
    %69 = vector.load %arg3[%c1_60, %c0_61, %c0_62] : memref<2x1x128xf32, #tpu.memory_space<vmem>>, vector<1x1x128xf32>
    %70 = vector.shape_cast %69 : vector<1x1x128xf32> to vector<1x128xf32>
    %71 = vector.broadcast %70 : vector<1x128xf32> to vector<8x128xf32>
    %72 = arith.mulf %68, %71 : vector<8x128xf32>
    %c1_63 = arith.constant 1 : index
    %c0_64 = arith.constant 0 : index
    %c0_65 = arith.constant 0 : index
    %73 = vector.load %arg8[%c1_63, %c0_64, %c0_65] : memref<2x8x128xf32, #tpu.memory_space<vmem>>, vector<1x8x128xf32>
    %74 = vector.shape_cast %73 : vector<1x8x128xf32> to vector<8x128xf32>
    %75 = vector.shape_cast %72 : vector<8x128xf32> to vector<1x8x128xf32>
    tpu.vector_store %arg8[%c1_63, %c0_64, %c0_65], %75 {strides = array<i32>} : memref<2x8x128xf32, #tpu.memory_space<vmem>>, vector<1x8x128xf32>,
    return
  }
  func.func @transform_0(%arg0: i32, %arg1: i32) -> (i32, i32, i32) {
    %c0_i32 = arith.constant 0 : i32
    %c0_i32_0 = arith.constant 0 : i32
    return %arg0, %c0_i32, %arg1 : i32, i32, i32
  }
  func.func @transform_1(%arg0: i32, %arg1: i32) -> (i32, i32, i32) {
    %c0_i32 = arith.constant 0 : i32
    %c0_i32_0 = arith.constant 0 : i32
    return %arg0, %c0_i32, %arg1 : i32, i32, i32
  }
  func.func @transform_2(%arg0: i32, %arg1: i32) -> (i32, i32, i32) {
    %c0_i32 = arith.constant 0 : i32
    %c0_i32_0 = arith.constant 0 : i32
    %c0_i32_1 = arith.constant 0 : i32
    %c0_i32_2 = arith.constant 0 : i32
    return %c0_i32, %c0_i32_0, %c0_i32_1 : i32, i32, i32
  }
  func.func @transform_3(%arg0: i32, %arg1: i32) -> (i32, i32) {
    %c0_i32 = arith.constant 0 : i32
    %c0_i32_0 = arith.constant 0 : i32
    %c0_i32_1 = arith.constant 0 : i32
    return %c0_i32, %c0_i32_0 : i32, i32
  }
  func.func @transform_4(%arg0: i32, %arg1: i32) -> (i32, i32) {
    %c0_i32 = arith.constant 0 : i32
    %c0_i32_0 = arith.constant 0 : i32
    %c0_i32_1 = arith.constant 0 : i32
    return %c0_i32, %c0_i32_0 : i32, i32
  }
  func.func @transform_5(%arg0: i32, %arg1: i32) -> (i32, i32) {
    %c0_i32 = arith.constant 0 : i32
    %c0_i32_0 = arith.constant 0 : i32
    %c0_i32_1 = arith.constant 0 : i32
    return %c0_i32, %c0_i32_0 : i32, i32
  }
  func.func @transform_6(%arg0: i32, %arg1: i32) -> (i32, i32, i32) {
    %c0_i32 = arith.constant 0 : i32
    %c0_i32_0 = arith.constant 0 : i32
    return %arg0, %c0_i32, %arg1 : i32, i32, i32
  }
}

</mosaic_0001>

<llo_original>
// kernel: tpu_custom_call.1
$region0: #{tpu_custom_call.1}
  #allocation0 [shape = 'u32[]', space=smem, size = 0x4, offset = 0x4, fixed_abs, tag = 'smem constant byte address 0x4 - core index']
  #allocation1 [shape = 'u32[144,128]{1,0:T(1,128)}', space=vmem, size = 0x12000, scoped, tag = 'internal scratch']
  #allocation2 [shape = 'f32[2,8,132]{2,1,0:T(8,128)}', space=vmem, size = 0x4000, scoped, tag = 'scratch operand']
  %s0 = inlined_call_operand.hbm [shape: f32[2,8,128], index: 0, kind: input, shape index: {}]
  %s1 = inlined_call_operand.hbm [shape: f32[2,1,128], index: 1, kind: input, shape index: {}]
  %s2 = inlined_call_operand.vmem [shape: f32[3,8,8], index: 2, kind: input, shape index: {}]
  %s3 = inlined_call_operand.vmem [shape: f32[8,1], index: 3, kind: input, shape index: {}]
  %s4 = inlined_call_operand.vmem [shape: f32[8,8], index: 4, kind: input, shape index: {}]
  %s5 = inlined_call_operand.vmem [shape: f32[8,1], index: 5, kind: input, shape index: {}]
  %s6 = inlined_call_operand.hbm [shape: f32[2,8,128], index: 6, kind: output, shape index: {}]
  %s7 = sld [smem:[#allocation0]]
  $region46: #{tpu_custom_call.1} parent=0
    _
  %s9 = ssub.s32 1, %s7
  %s10 = scalar_select 0, %s9, %s7
  $region1: #{tpu_custom_call.1} parent=0
    #allocation3 [shape = 'u8[8192]{0}', space=vmem, size = 0x2000, scoped, tag = 'input window, operand 0, single buffered']
    #allocation4 [shape = 's32[1]{0}', space=sflag, size = 0x4, scoped, tag = 'scoped memory for tpu_custom_call.1']
    #allocation5 [shape = 's32[1]{0}', space=sflag, size = 0x4, scoped, tag = 'scoped memory for tpu_custom_call.1']
    #allocation6 [shape = 'u8[1024]{0}', space=vmem, size = 0x400, scoped, tag = 'input window, operand 1, single buffered']
    #allocation7 [shape = 's32[1]{0}', space=sflag, size = 0x4, scoped, tag = 'scoped memory for tpu_custom_call.1']
    #allocation8 [shape = 'u8[8192]{0}', space=vmem, size = 0x2000, scoped, tag = 'output window, operand 0, single buffered']
    %11 = vsyncpa [#allocation4], 0
    %12 = vsyncpa [#allocation7], 0
    %13 = vsyncpa [#allocation5], 0
    // Predicated region
    $region2: #{tpu_custom_call.1} parent=1 // pred_check
      _
    $region3: #{tpu_custom_call.1} parent=1 // pred_check_branch
      %15 = sbr.rel (0) target = $region5
    $region4: #{tpu_custom_call.1} parent=1 // pred_region
      %s17 = ssub.s32 256, 256
      %18 = vsyncadd [#allocation4], %s17
      %s19 = sshll.u32 [#allocation3], 4
      %s20 = int_to_ptr.vmem [resolvable:$true] %s19
      %25 = dma.hbm_to_vmem [thread:$0]  %s0, 256, %s20, [#allocation4], 128, 128, 8
    $region5: #{tpu_custom_call.1} parent=1 // pred_fallthru
      _
    // Predicated region
    $region6: #{tpu_custom_call.1} parent=1 // pred_check
      _
    $region7: #{tpu_custom_call.1} parent=1 // pred_check_branch
      %27 = sbr.rel (0) target = $region9
    $region8: #{tpu_custom_call.1} parent=1 // pred_region
      %s29 = ssub.s32 32, 32
      %30 = vsyncadd [#allocation7], %s29
      %s31 = sshll.u32 [#allocation6], 4
      %s32 = int_to_ptr.vmem [resolvable:$true] %s31
      %37 = dma.hbm_to_vmem [thread:$0]  %s1, 32, %s32, [#allocation7], 16, 16, 1
    $region9: #{tpu_custom_call.1} parent=1 // pred_fallthru
      _
    // Predicated region
    $region10: #{tpu_custom_call.1} parent=1 // pred_check
      _
    $region11: #{tpu_custom_call.1} parent=1 // pred_check_branch
      %39 = sbr.rel (0) target = $region13
    $region12: #{tpu_custom_call.1} parent=1 // pred_region
      _
    $region13: #{tpu_custom_call.1} parent=1 // pred_fallthru
      _
    // Predicated region
    $region14: #{tpu_custom_call.1} parent=1 // pred_check
      _
    $region15: #{tpu_custom_call.1} parent=1 // pred_check_branch
      %41 = sbr.rel (0) target = $region17
    $region16: #{tpu_custom_call.1} parent=1 // pred_region
      _
    $region17: #{tpu_custom_call.1} parent=1 // pred_fallthru
      _
    // Predicated region
    $region18: #{tpu_custom_call.1} parent=1 // pred_check
      _
    $region19: #{tpu_custom_call.1} parent=1 // pred_check_branch
      %43 = sbr.rel (0) target = $region21
    $region20: #{tpu_custom_call.1} parent=1 // pred_region
      _
    $region21: #{tpu_custom_call.1} parent=1 // pred_fallthru
      _
    // Predicated region
    $region22: #{tpu_custom_call.1} parent=1 // pred_check
      _
    $region23: #{tpu_custom_call.1} parent=1 // pred_check_branch
      %45 = sbr.rel (0) target = $region25
    $region24: #{tpu_custom_call.1} parent=1 // pred_region
      _
    $region25: #{tpu_custom_call.1} parent=1 // pred_fallthru
      _
    // Predicated region
    $region26: #{tpu_custom_call.1} parent=1 // pred_check
      _
    $region27: #{tpu_custom_call.1} parent=1 // pred_check_branch
      %47 = sbr.rel (0) target = $region29
    $region28: #{tpu_custom_call.1} parent=1 // pred_region
      %48 = dma.done [#allocation4], 256
    $region29: #{tpu_custom_call.1} parent=1 // pred_fallthru
      _
    // Predicated region
    $region30: #{tpu_custom_call.1} parent=1 // pred_check
      _
    $region31: #{tpu_custom_call.1} parent=1 // pred_check_branch
      %50 = sbr.rel (0) target = $region33
    $region32: #{tpu_custom_call.1} parent=1 // pred_region
      %51 = dma.done [#allocation7], 32
    $region33: #{tpu_custom_call.1} parent=1 // pred_fallthru
      _
    %p52 = scmp.eq.s32.totalorder 0, 0
    // Predicated region
    $region34: #{tpu_custom_call.1} parent=1 // pred_check
      %p53 = pneg %p52
    $region35: #{tpu_custom_call.1} parent=1 // pred_check_branch
      %55 = sbr.rel (%p53) target = $region37
    $region36: #{tpu_custom_call.1} parent=1 // pred_region
      %vm56 = vcmask 31744
      %57 = vst.msk [vmem:[#allocation2] sm:$0xff] %vm56, 0.0
      %s58 = scalar_lea.vmem [#allocation2], 16
      %59 = vst.msk [vmem:[%s58] sm:$0xff] %vm56, 0.0
    $region37: #{tpu_custom_call.1} parent=1 // pred_fallthru
      _
    %v60 = vld [vmem:[%s3] sm:$0xff]
    %v61 = vld [vmem:[%s5] sm:$0xff]
    %v62 = vld [vmem:[%s4] sm:$0xff]
    %v63 = vld [vmem:[#allocation3] sm:$0xff]
    %65 = vrot.lane.b32.xlu0 %v63, 4
    %v66 = vpop.permute.xlu0 %65
    %vm68 = vcmask 1047584
    %69 = vst.msk [vmem:[#allocation2] sm:$0xff] %vm68, %v66
    %vm70 = vcmask 31744
    %71 = vst.msk [vmem:[#allocation2 + $0x8] sm:$0xff] %vm70, %v66
    %s72 = scalar_lea.vmem %s2, 16
    %v73 = vld [vmem:[%s72] sm:$0xff]
    %v74 = vld [vmem:[%s2] sm:$0xff]
    %v75 = vld [vmem:[#allocation2] sm:$0xff]
    %vm76 = vcmask 64512
    %v78 = vsel %vm76, %v74, 0
    %80 = vmatprep.subr.mxu0 0.0
    %81 = vmatpush1.msra.mxu0 %v75
    %82 = vmatprep.subr.mxu0 0.0
    %83 = vmatpush1.msra.mxu0 0.0
    %84 = vmatprep.subr.mxu0 0.0
    %85 = vmatpush1.msra.mxu0 0.0
    %86 = vmatprep.subr.mxu0 0.0
    %87 = vmatpush1.msra.mxu0 0.0
    %88 = vmatprep.subr.mxu0 0.0
    %89 = vmatpush1.msra.mxu0 0.0
    %90 = vmatprep.subr.mxu0 0.0
    %91 = vmatpush1.msra.mxu0 0.0
    %92 = vmatprep.subr.mxu0 0.0
    %93 = vmatpush1.msra.mxu0 0.0
    %94 = vmatprep.subr.mxu0 0.0
    %95 = vmatpush1.msra.mxu0 0.0
    %96 = vmatprep.subr.mxu0 0.0
    %97 = vmatpush1.msra.mxu0 0.0
    %98 = vmatprep.subr.mxu0 0.0
    %99 = vmatpush1.msra.mxu0 0.0
    %100 = vmatprep.subr.mxu0 0.0
    %101 = vmatpush1.msra.mxu0 0.0
    %102 = vmatprep.subr.mxu0 0.0
    %103 = vmatpush1.msra.mxu0 0.0
    %104 = vmatprep.subr.mxu0 0.0
    %105 = vmatpush1.msra.mxu0 0.0
    %106 = vmatprep.subr.mxu0 0.0
    %107 = vmatpush1.msra.mxu0 0.0
    %108 = vmatprep.subr.mxu0 0.0
    %109 = vmatpush1.msra.mxu0 0.0
    %110 = vmatprep.subr.mxu0 0.0
    %111 = vmatpush1.msra.mxu0 0.0
    %112 = vmatprep.subr.mxu0 0.0
    %113 = vmatpush1.msra.mxu0 0.0
    %114 = vmatprep.subr.mxu0 0.0
    %115 = vmatpush1.msra.mxu0 0.0
    %116 = vmatprep.subr.mxu0 0.0
    %117 = vmatpush1.msra.mxu0 0.0
    %118 = vmatprep.subr.mxu0 0.0
    %119 = vmatpush1.msra.mxu0 0.0
    %120 = vmatprep.subr.mxu0 0.0
    %121 = vmatpush1.msra.mxu0 0.0
    %122 = vmatprep.subr.mxu0 0.0
    %123 = vmatpush1.msra.mxu0 0.0
    %124 = vmatprep.subr.mxu0 0.0
    %125 = vmatpush1.msra.mxu0 0.0
    %126 = vmatprep.subr.mxu0 0.0
    %127 = vmatpush1.msra.mxu0 0.0
    %128 = vmatprep.subr.mxu0 0.0
    %129 = vmatpush1.msra.mxu0 0.0
    %130 = vmatprep.subr.mxu0 0.0
    %131 = vmatpush1.msra.mxu0 0.0
    %132 = vmatprep.subr.mxu0 0.0
    %133 = vmatpush1.msra.mxu0 0.0
    %134 = vmatprep.subr.mxu0 0.0
    %135 = vmatpush1.msra.mxu0 0.0
    %136 = vmatprep.subr.mxu0 0.0
    %137 = vmatpush1.msra.mxu0 0.0
    %138 = vmatprep.subr.mxu0 0.0
    %139 = vmatpush1.msra.mxu0 0.0
    %140 = vmatprep.subr.mxu0 0.0
    %141 = vmatpush1.msra.mxu0 0.0
    %142 = vmatprep.subr.mxu0 0.0
    %143 = vmatpush1.msra.mxu0 0.0
    %144 = vmatprep.mubr.f32.mxu0 0.0
    %145 = vmatmul.mubr.f32.gmra.mrb[0].mxu0 %v78
    %v146 = vpop.f32.mrb[0].mxu0
    %v147 = vadd.f32 0.0, %v146
    %v148 = vpop.f32.mrb[0].mxu0
    %149 = vdwg.mxu0
    %v151 = vsel %vm76, %v73, 0
    %153 = vmatprep.subr.mxu0 0.0
    %154 = vmatpush1.msra.mxu0 %v63
    %155 = vmatprep.subr.mxu0 0.0
    %156 = vmatpush1.msra.mxu0 0.0
    %157 = vmatprep.subr.mxu0 0.0
    %158 = vmatpush1.msra.mxu0 0.0
    %159 = vmatprep.subr.mxu0 0.0
    %160 = vmatpush1.msra.mxu0 0.0
    %161 = vmatprep.subr.mxu0 0.0
    %162 = vmatpush1.msra.mxu0 0.0
    %163 = vmatprep.subr.mxu0 0.0
    %164 = vmatpush1.msra.mxu0 0.0
    %165 = vmatprep.subr.mxu0 0.0
    %166 = vmatpush1.msra.mxu0 0.0
    %167 = vmatprep.subr.mxu0 0.0
    %168 = vmatpush1.msra.mxu0 0.0
    %169 = vmatprep.subr.mxu0 0.0
    %170 = vmatpush1.msra.mxu0 0.0
    %171 = vmatprep.subr.mxu0 0.0
    %172 = vmatpush1.msra.mxu0 0.0
    %173 = vmatprep.subr.mxu0 0.0
    %174 = vmatpush1.msra.mxu0 0.0
    %175 = vmatprep.subr.mxu0 0.0
    %176 = vmatpush1.msra.mxu0 0.0
    %177 = vmatprep.subr.mxu0 0.0
    %178 = vmatpush1.msra.mxu0 0.0
    %179 = vmatprep.subr.mxu0 0.0
    %180 = vmatpush1.msra.mxu0 0.0
    %181 = vmatprep.subr.mxu0 0.0
    %182 = vmatpush1.msra.mxu0 0.0
    %183 = vmatprep.subr.mxu0 0.0
    %184 = vmatpush1.msra.mxu0 0.0
    %185 = vmatprep.subr.mxu0 0.0
    %186 = vmatpush1.msra.mxu0 0.0
    %187 = vmatprep.subr.mxu0 0.0
    %188 = vmatpush1.msra.mxu0 0.0
    %189 = vmatprep.subr.mxu0 0.0
    %190 = vmatpush1.msra.mxu0 0.0
    %191 = vmatprep.subr.mxu0 0.0
    %192 = vmatpush1.msra.mxu0 0.0
    %193 = vmatprep.subr.mxu0 0.0
    %194 = vmatpush1.msra.mxu0 0.0
    %195 = vmatprep.subr.mxu0 0.0
    %196 = vmatpush1.msra.mxu0 0.0
    %197 = vmatprep.subr.mxu0 0.0
    %198 = vmatpush1.msra.mxu0 0.0
    %199 = vmatprep.subr.mxu0 0.0
    %200 = vmatpush1.msra.mxu0 0.0
    %201 = vmatprep.subr.mxu0 0.0
    %202 = vmatpush1.msra.mxu0 0.0
    %203 = vmatprep.subr.mxu0 0.0
    %204 = vmatpush1.msra.mxu0 0.0
    %205 = vmatprep.subr.mxu0 0.0
    %206 = vmatpush1.msra.mxu0 0.0
    %207 = vmatprep.subr.mxu0 0.0
    %208 = vmatpush1.msra.mxu0 0.0
    %209 = vmatprep.subr.mxu0 0.0
    %210 = vmatpush1.msra.mxu0 0.0
    %211 = vmatprep.subr.mxu0 0.0
    %212 = vmatpush1.msra.mxu0 0.0
    %213 = vmatprep.subr.mxu0 0.0
    %214 = vmatpush1.msra.mxu0 0.0
    %215 = vmatprep.subr.mxu0 0.0
    %216 = vmatpush1.msra.mxu0 0.0
    %217 = vmatprep.mubr.f32.mxu0 0.0
    %218 = vmatmul.mubr.f32.gmra.mrb[0].mxu0 %v151
    %v219 = vpop.f32.mrb[0].mxu0
    %v220 = vadd.f32 %v147, %v219
    %v221 = vpop.f32.mrb[0].mxu0
    %222 = vdwg.mxu0
    %s223 = scalar_lea.vmem %s2, 8
    %v224 = vld [vmem:[%s223] sm:$0xff]
    %v225 = vld [vmem:[#allocation2] sm:$0xff]
    %v226 = vld [vmem:[#allocation2 + $0x8] sm:$0xff]
    %229 = vrot.lane.b32.xlu0 %v225, 126
    %v230 = vpop.permute.xlu0 %229
    %231 = vrot.lane.b32.xlu0 %v226, 126
    %v232 = vpop.permute.xlu0 %231
    %vm233 = vcmask 1031168
    %v234 = vsel %vm233, %v230, %v232
    %v237 = vsel %vm76, %v224, 0
    %239 = vmatprep.subr.mxu0 0.0
    %240 = vmatpush1.msra.mxu0 %v234
    %241 = vmatprep.subr.mxu0 0.0
    %242 = vmatpush1.msra.mxu0 0.0
    %243 = vmatprep.subr.mxu0 0.0
    %244 = vmatpush1.msra.mxu0 0.0
    %245 = vmatprep.subr.mxu0 0.0
    %246 = vmatpush1.msra.mxu0 0.0
    %247 = vmatprep.subr.mxu0 0.0
    %248 = vmatpush1.msra.mxu0 0.0
    %249 = vmatprep.subr.mxu0 0.0
    %250 = vmatpush1.msra.mxu0 0.0
    %251 = vmatprep.subr.mxu0 0.0
    %252 = vmatpush1.msra.mxu0 0.0
    %253 = vmatprep.subr.mxu0 0.0
    %254 = vmatpush1.msra.mxu0 0.0
    %255 = vmatprep.subr.mxu0 0.0
    %256 = vmatpush1.msra.mxu0 0.0
    %257 = vmatprep.subr.mxu0 0.0
    %258 = vmatpush1.msra.mxu0 0.0
    %259 = vmatprep.subr.mxu0 0.0
    %260 = vmatpush1.msra.mxu0 0.0
    %261 = vmatprep.subr.mxu0 0.0
    %262 = vmatpush1.msra.mxu0 0.0
    %263 = vmatprep.subr.mxu0 0.0
    %264 = vmatpush1.msra.mxu0 0.0
    %265 = vmatprep.subr.mxu0 0.0
    %266 = vmatpush1.msra.mxu0 0.0
    %267 = vmatprep.subr.mxu0 0.0
    %268 = vmatpush1.msra.mxu0 0.0
    %269 = vmatprep.subr.mxu0 0.0
    %270 = vmatpush1.msra.mxu0 0.0
    %271 = vmatprep.subr.mxu0 0.0
    %272 = vmatpush1.msra.mxu0 0.0
    %273 = vmatprep.subr.mxu0 0.0
    %274 = vmatpush1.msra.mxu0 0.0
    %275 = vmatprep.subr.mxu0 0.0
    %276 = vmatpush1.msra.mxu0 0.0
    %277 = vmatprep.subr.mxu0 0.0
    %278 = vmatpush1.msra.mxu0 0.0
    %279 = vmatprep.subr.mxu0 0.0
    %280 = vmatpush1.msra.mxu0 0.0
    %281 = vmatprep.subr.mxu0 0.0
    %282 = vmatpush1.msra.mxu0 0.0
    %283 = vmatprep.subr.mxu0 0.0
    %284 = vmatpush1.msra.mxu0 0.0
    %285 = vmatprep.subr.mxu0 0.0
    %286 = vmatpush1.msra.mxu0 0.0
    %287 = vmatprep.subr.mxu0 0.0
    %288 = vmatpush1.msra.mxu0 0.0
    %289 = vmatprep.subr.mxu0 0.0
    %290 = vmatpush1.msra.mxu0 0.0
    %291 = vmatprep.subr.mxu0 0.0
    %292 = vmatpush1.msra.mxu0 0.0
    %293 = vmatprep.subr.mxu0 0.0
    %294 = vmatpush1.msra.mxu0 0.0
    %295 = vmatprep.subr.mxu0 0.0
    %296 = vmatpush1.msra.mxu0 0.0
    %297 = vmatprep.subr.mxu0 0.0
    %298 = vmatpush1.msra.mxu0 0.0
    %299 = vmatprep.subr.mxu0 0.0
    %300 = vmatpush1.msra.mxu0 0.0
    %301 = vmatprep.subr.mxu0 0.0
    %302 = vmatpush1.msra.mxu0 0.0
    %303 = vmatprep.mubr.f32.mxu0 0.0
    %304 = vmatmul.mubr.f32.gmra.mrb[0].mxu0 %v237
    %v305 = vpop.f32.mrb[0].mxu0
    %v306 = vadd.f32 0.0, %v305
    %v307 = vpop.f32.mrb[0].mxu0
    %308 = vdwg.mxu0
    %v309 = vadd.f32 %v220, %v306
    %311 = vset.pattern.permute.xlu0 0
    %312 = vperm.xlu0 %311, %v60
    %v313 = vpop.permute.xlu0 %312
    %v315 = vadd.f32 %v309, %v313
    %v316 = vmax.f32 %v315, 0.0
    %318 = vset.pattern.permute.xlu0 0
    %319 = vperm.xlu0 %318, %v61
    %v320 = vpop.permute.xlu0 %319
    %v323 = vsel %vm76, %v62, 0
    %325 = vmatprep.subr.mxu0 0.0
    %326 = vmatpush1.msra.mxu0 %v316
    %327 = vmatprep.subr.mxu0 0.0
    %328 = vmatpush1.msra.mxu0 0.0
    %329 = vmatprep.subr.mxu0 0.0
    %330 = vmatpush1.msra.mxu0 0.0
    %331 = vmatprep.subr.mxu0 0.0
    %332 = vmatpush1.msra.mxu0 0.0
    %333 = vmatprep.subr.mxu0 0.0
    %334 = vmatpush1.msra.mxu0 0.0
    %335 = vmatprep.subr.mxu0 0.0
    %336 = vmatpush1.msra.mxu0 0.0
    %337 = vmatprep.subr.mxu0 0.0
    %338 = vmatpush1.msra.mxu0 0.0
    %339 = vmatprep.subr.mxu0 0.0
    %340 = vmatpush1.msra.mxu0 0.0
    %341 = vmatprep.subr.mxu0 0.0
    %342 = vmatpush1.msra.mxu0 0.0
    %343 = vmatprep.subr.mxu0 0.0
    %344 = vmatpush1.msra.mxu0 0.0
    %345 = vmatprep.subr.mxu0 0.0
    %346 = vmatpush1.msra.mxu0 0.0
    %347 = vmatprep.subr.mxu0 0.0
    %348 = vmatpush1.msra.mxu0 0.0
    %349 = vmatprep.subr.mxu0 0.0
    %350 = vmatpush1.msra.mxu0 0.0
    %351 = vmatprep.subr.mxu0 0.0
    %352 = vmatpush1.msra.mxu0 0.0
    %353 = vmatprep.subr.mxu0 0.0
    %354 = vmatpush1.msra.mxu0 0.0
    %355 = vmatprep.subr.mxu0 0.0
    %356 = vmatpush1.msra.mxu0 0.0
    %357 = vmatprep.subr.mxu0 0.0
    %358 = vmatpush1.msra.mxu0 0.0
    %359 = vmatprep.subr.mxu0 0.0
    %360 = vmatpush1.msra.mxu0 0.0
    %361 = vmatprep.subr.mxu0 0.0
    %362 = vmatpush1.msra.mxu0 0.0
    %363 = vmatprep.subr.mxu0 0.0
    %364 = vmatpush1.msra.mxu0 0.0
    %365 = vmatprep.subr.mxu0 0.0
    %366 = vmatpush1.msra.mxu0 0.0
    %367 = vmatprep.subr.mxu0 0.0
    %368 = vmatpush1.msra.mxu0 0.0
    %369 = vmatprep.subr.mxu0 0.0
    %370 = vmatpush1.msra.mxu0 0.0
    %371 = vmatprep.subr.mxu0 0.0
    %372 = vmatpush1.msra.mxu0 0.0
    %373 = vmatprep.subr.mxu0 0.0
    %374 = vmatpush1.msra.mxu0 0.0
    %375 = vmatprep.subr.mxu0 0.0
    %376 = vmatpush1.msra.mxu0 0.0
    %377 = vmatprep.subr.mxu0 0.0
    %378 = vmatpush1.msra.mxu0 0.0
    %379 = vmatprep.subr.mxu0 0.0
    %380 = vmatpush1.msra.mxu0 0.0
    %381 = vmatprep.subr.mxu0 0.0
    %382 = vmatpush1.msra.mxu0 0.0
    %383 = vmatprep.subr.mxu0 0.0
    %384 = vmatpush1.msra.mxu0 0.0
    %385 = vmatprep.subr.mxu0 0.0
    %386 = vmatpush1.msra.mxu0 0.0
    %387 = vmatprep.subr.mxu0 0.0
    %388 = vmatpush1.msra.mxu0 0.0
    %389 = vmatprep.mubr.f32.mxu0 0.0
    %390 = vmatmul.mubr.f32.gmra.mrb[0].mxu0 %v323
    %v391 = vpop.f32.mrb[0].mxu0
    %v392 = vadd.f32 %v320, %v391
    %v393 = vpop.f32.mrb[0].mxu0
    %394 = vdwg.mxu0
    %v395 = vadd.f32 %v63, %v392
    %v396 = vld [vmem:[#allocation6] sm:$0x1]
    %v398 = vlaneseq
    %v399 = vshrl.u32 %v398, 7
    %v400 = vsub.s32 0, %v399
    %v401 = vrot.slane %v396, %v400
    %v403 = vmul.f32 %v395, %v401
    %404 = vst [vmem:[#allocation8] sm:$0xff] %v403
    %s405 = scalar_lea.vmem [#allocation3], 8
    %v406 = vld [vmem:[%s405] sm:$0xff]
    %408 = vrot.lane.b32.xlu0 %v406, 4
    %v409 = vpop.permute.xlu0 %408
    %s411 = scalar_lea.vmem [#allocation2], 16
    %412 = vst.msk [vmem:[%s411] sm:$0xff] %vm68, %v409
    %413 = vst.msk [vmem:[%s411 + $0x8] sm:$0xff] %vm70, %v409
    %v414 = vld [vmem:[%s72] sm:$0xff]
    %v415 = vld [vmem:[%s2] sm:$0xff]
    %v416 = vld [vmem:[%s411] sm:$0xff]
    %v418 = vsel %vm76, %v415, 0
    %420 = vmatprep.subr.mxu0 0.0
    %421 = vmatpush1.msra.mxu0 %v416
    %422 = vmatprep.subr.mxu0 0.0
    %423 = vmatpush1.msra.mxu0 0.0
    %424 = vmatprep.subr.mxu0 0.0
    %425 = vmatpush1.msra.mxu0 0.0
    %426 = vmatprep.subr.mxu0 0.0
    %427 = vmatpush1.msra.mxu0 0.0
    %428 = vmatprep.subr.mxu0 0.0
    %429 = vmatpush1.msra.mxu0 0.0
    %430 = vmatprep.subr.mxu0 0.0
    %431 = vmatpush1.msra.mxu0 0.0
    %432 = vmatprep.subr.mxu0 0.0
    %433 = vmatpush1.msra.mxu0 0.0
    %434 = vmatprep.subr.mxu0 0.0
    %435 = vmatpush1.msra.mxu0 0.0
    %436 = vmatprep.subr.mxu0 0.0
    %437 = vmatpush1.msra.mxu0 0.0
    %438 = vmatprep.subr.mxu0 0.0
    %439 = vmatpush1.msra.mxu0 0.0
    %440 = vmatprep.subr.mxu0 0.0
    %441 = vmatpush1.msra.mxu0 0.0
    %442 = vmatprep.subr.mxu0 0.0
    %443 = vmatpush1.msra.mxu0 0.0
    %444 = vmatprep.subr.mxu0 0.0
    %445 = vmatpush1.msra.mxu0 0.0
    %446 = vmatprep.subr.mxu0 0.0
    %447 = vmatpush1.msra.mxu0 0.0
    %448 = vmatprep.subr.mxu0 0.0
    %449 = vmatpush1.msra.mxu0 0.0
    %450 = vmatprep.subr.mxu0 0.0
    %451 = vmatpush1.msra.mxu0 0.0
    %452 = vmatprep.subr.mxu0 0.0
    %453 = vmatpush1.msra.mxu0 0.0
    %454 = vmatprep.subr.mxu0 0.0
    %455 = vmatpush1.msra.mxu0 0.0
    %456 = vmatprep.subr.mxu0 0.0
    %457 = vmatpush1.msra.mxu0 0.0
    %458 = vmatprep.subr.mxu0 0.0
    %459 = vmatpush1.msra.mxu0 0.0
    %460 = vmatprep.subr.mxu0 0.0
    %461 = vmatpush1.msra.mxu0 0.0
    %462 = vmatprep.subr.mxu0 0.0
    %463 = vmatpush1.msra.mxu0 0.0
    %464 = vmatprep.subr.mxu0 0.0
    %465 = vmatpush1.msra.mxu0 0.0
    %466 = vmatprep.subr.mxu0 0.0
    %467 = vmatpush1.msra.mxu0 0.0
    %468 = vmatprep.subr.mxu0 0.0
    %469 = vmatpush1.msra.mxu0 0.0
    %470 = vmatprep.subr.mxu0 0.0
    %471 = vmatpush1.msra.mxu0 0.0
    %472 = vmatprep.subr.mxu0 0.0
    %473 = vmatpush1.msra.mxu0 0.0
    %474 = vmatprep.subr.mxu0 0.0
    %475 = vmatpush1.msra.mxu0 0.0
    %476 = vmatprep.subr.mxu0 0.0
    %477 = vmatpush1.msra.mxu0 0.0
    %478 = vmatprep.subr.mxu0 0.0
    %479 = vmatpush1.msra.mxu0 0.0
    %480 = vmatprep.subr.mxu0 0.0
    %481 = vmatpush1.msra.mxu0 0.0
    %482 = vmatprep.subr.mxu0 0.0
    %483 = vmatpush1.msra.mxu0 0.0
    %484 = vmatprep.mubr.f32.mxu0 0.0
    %485 = vmatmul.mubr.f32.gmra.mrb[0].mxu0 %v418
    %v486 = vpop.f32.mrb[0].mxu0
    %v487 = vadd.f32 0.0, %v486
    %v488 = vpop.f32.mrb[0].mxu0
    %489 = vdwg.mxu0
    %v491 = vsel %vm76, %v414, 0
    %493 = vmatprep.subr.mxu0 0.0
    %494 = vmatpush1.msra.mxu0 %v406
    %495 = vmatprep.subr.mxu0 0.0
    %496 = vmatpush1.msra.mxu0 0.0
    %497 = vmatprep.subr.mxu0 0.0
    %498 = vmatpush1.msra.mxu0 0.0
    %499 = vmatprep.subr.mxu0 0.0
    %500 = vmatpush1.msra.mxu0 0.0
    %501 = vmatprep.subr.mxu0 0.0
    %502 = vmatpush1.msra.mxu0 0.0
    %503 = vmatprep.subr.mxu0 0.0
    %504 = vmatpush1.msra.mxu0 0.0
    %505 = vmatprep.subr.mxu0 0.0
    %506 = vmatpush1.msra.mxu0 0.0
    %507 = vmatprep.subr.mxu0 0.0
    %508 = vmatpush1.msra.mxu0 0.0
    %509 = vmatprep.subr.mxu0 0.0
    %510 = vmatpush1.msra.mxu0 0.0
    %511 = vmatprep.subr.mxu0 0.0
    %512 = vmatpush1.msra.mxu0 0.0
    %513 = vmatprep.subr.mxu0 0.0
    %514 = vmatpush1.msra.mxu0 0.0
    %515 = vmatprep.subr.mxu0 0.0
    %516 = vmatpush1.msra.mxu0 0.0
    %517 = vmatprep.subr.mxu0 0.0
    %518 = vmatpush1.msra.mxu0 0.0
    %519 = vmatprep.subr.mxu0 0.0
    %520 = vmatpush1.msra.mxu0 0.0
    %521 = vmatprep.subr.mxu0 0.0
    %522 = vmatpush1.msra.mxu0 0.0
    %523 = vmatprep.subr.mxu0 0.0
    %524 = vmatpush1.msra.mxu0 0.0
    %525 = vmatprep.subr.mxu0 0.0
    %526 = vmatpush1.msra.mxu0 0.0
    %527 = vmatprep.subr.mxu0 0.0
    %528 = vmatpush1.msra.mxu0 0.0
    %529 = vmatprep.subr.mxu0 0.0
    %530 = vmatpush1.msra.mxu0 0.0
    %531 = vmatprep.subr.mxu0 0.0
    %532 = vmatpush1.msra.mxu0 0.0
    %533 = vmatprep.subr.mxu0 0.0
    %534 = vmatpush1.msra.mxu0 0.0
    %535 = vmatprep.subr.mxu0 0.0
    %536 = vmatpush1.msra.mxu0 0.0
    %537 = vmatprep.subr.mxu0 0.0
    %538 = vmatpush1.msra.mxu0 0.0
    %539 = vmatprep.subr.mxu0 0.0
    %540 = vmatpush1.msra.mxu0 0.0
    %541 = vmatprep.subr.mxu0 0.0
    %542 = vmatpush1.msra.mxu0 0.0
    %543 = vmatprep.subr.mxu0 0.0
    %544 = vmatpush1.msra.mxu0 0.0
    %545 = vmatprep.subr.mxu0 0.0
    %546 = vmatpush1.msra.mxu0 0.0
    %547 = vmatprep.subr.mxu0 0.0
    %548 = vmatpush1.msra.mxu0 0.0
    %549 = vmatprep.subr.mxu0 0.0
    %550 = vmatpush1.msra.mxu0 0.0
    %551 = vmatprep.subr.mxu0 0.0
    %552 = vmatpush1.msra.mxu0 0.0
    %553 = vmatprep.subr.mxu0 0.0
    %554 = vmatpush1.msra.mxu0 0.0
    %555 = vmatprep.subr.mxu0 0.0
    %556 = vmatpush1.msra.mxu0 0.0
    %557 = vmatprep.mubr.f32.mxu0 0.0
    %558 = vmatmul.mubr.f32.gmra.mrb[0].mxu0 %v491
    %v559 = vpop.f32.mrb[0].mxu0
    %v560 = vadd.f32 %v487, %v559
    %v561 = vpop.f32.mrb[0].mxu0
    %562 = vdwg.mxu0
    %v563 = vld [vmem:[%s223] sm:$0xff]
    %v564 = vld [vmem:[%s411] sm:$0xff]
    %v565 = vld [vmem:[%s411 + $0x8] sm:$0xff]
    %568 = vrot.lane.b32.xlu0 %v564, 126
    %v569 = vpop.permute.xlu0 %568
    %570 = vrot.lane.b32.xlu0 %v565, 126
    %v571 = vpop.permute.xlu0 %570
    %v572 = vsel %vm233, %v569, %v571
    %v575 = vsel %vm76, %v563, 0
    %577 = vmatprep.subr.mxu0 0.0
    %578 = vmatpush1.msra.mxu0 %v572
    %579 = vmatprep.subr.mxu0 0.0
    %580 = vmatpush1.msra.mxu0 0.0
    %581 = vmatprep.subr.mxu0 0.0
    %582 = vmatpush1.msra.mxu0 0.0
    %583 = vmatprep.subr.mxu0 0.0
    %584 = vmatpush1.msra.mxu0 0.0
    %585 = vmatprep.subr.mxu0 0.0
    %586 = vmatpush1.msra.mxu0 0.0
    %587 = vmatprep.subr.mxu0 0.0
    %588 = vmatpush1.msra.mxu0 0.0
    %589 = vmatprep.subr.mxu0 0.0
    %590 = vmatpush1.msra.mxu0 0.0
    %591 = vmatprep.subr.mxu0 0.0
    %592 = vmatpush1.msra.mxu0 0.0
    %593 = vmatprep.subr.mxu0 0.0
    %594 = vmatpush1.msra.mxu0 0.0
    %595 = vmatprep.subr.mxu0 0.0
    %596 = vmatpush1.msra.mxu0 0.0
    %597 = vmatprep.subr.mxu0 0.0
    %598 = vmatpush1.msra.mxu0 0.0
    %599 = vmatprep.subr.mxu0 0.0
    %600 = vmatpush1.msra.mxu0 0.0
    %601 = vmatprep.subr.mxu0 0.0
    %602 = vmatpush1.msra.mxu0 0.0
    %603 = vmatprep.subr.mxu0 0.0
    %604 = vmatpush1.msra.mxu0 0.0
    %605 = vmatprep.subr.mxu0 0.0
    %606 = vmatpush1.msra.mxu0 0.0
    %607 = vmatprep.subr.mxu0 0.0
    %608 = vmatpush1.msra.mxu0 0.0
    %609 = vmatprep.subr.mxu0 0.0
    %610 = vmatpush1.msra.mxu0 0.0
    %611 = vmatprep.subr.mxu0 0.0
    %612 = vmatpush1.msra.mxu0 0.0
    %613 = vmatprep.subr.mxu0 0.0
    %614 = vmatpush1.msra.mxu0 0.0
    %615 = vmatprep.subr.mxu0 0.0
    %616 = vmatpush1.msra.mxu0 0.0
    %617 = vmatprep.subr.mxu0 0.0
    %618 = vmatpush1.msra.mxu0 0.0
    %619 = vmatprep.subr.mxu0 0.0
    %620 = vmatpush1.msra.mxu0 0.0
    %621 = vmatprep.subr.mxu0 0.0
    %622 = vmatpush1.msra.mxu0 0.0
    %623 = vmatprep.subr.mxu0 0.0
    %624 = vmatpush1.msra.mxu0 0.0
    %625 = vmatprep.subr.mxu0 0.0
    %626 = vmatpush1.msra.mxu0 0.0
    %627 = vmatprep.subr.mxu0 0.0
    %628 = vmatpush1.msra.mxu0 0.0
    %629 = vmatprep.subr.mxu0 0.0
    %630 = vmatpush1.msra.mxu0 0.0
    %631 = vmatprep.subr.mxu0 0.0
    %632 = vmatpush1.msra.mxu0 0.0
    %633 = vmatprep.subr.mxu0 0.0
    %634 = vmatpush1.msra.mxu0 0.0
    %635 = vmatprep.subr.mxu0 0.0
    %636 = vmatpush1.msra.mxu0 0.0
    %637 = vmatprep.subr.mxu0 0.0
    %638 = vmatpush1.msra.mxu0 0.0
    %639 = vmatprep.subr.mxu0 0.0
    %640 = vmatpush1.msra.mxu0 0.0
    %641 = vmatprep.mubr.f32.mxu0 0.0
    %642 = vmatmul.mubr.f32.gmra.mrb[0].mxu0 %v575
    %v643 = vpop.f32.mrb[0].mxu0
    %v644 = vadd.f32 0.0, %v643
    %v645 = vpop.f32.mrb[0].mxu0
    %646 = vdwg.mxu0
    %v647 = vadd.f32 %v560, %v644
    %v648 = vadd.f32 %v647, %v313
    %v649 = vmax.f32 %v648, 0.0
    %650 = vmatprep.subr.mxu0 0.0
    %651 = vmatpush1.msra.mxu0 %v649
    %652 = vmatprep.subr.mxu0 0.0
    %653 = vmatpush1.msra.mxu0 0.0
    %654 = vmatprep.subr.mxu0 0.0
    %655 = vmatpush1.msra.mxu0 0.0
    %656 = vmatprep.subr.mxu0 0.0
    %657 = vmatpush1.msra.mxu0 0.0
    %658 = vmatprep.subr.mxu0 0.0
    %659 = vmatpush1.msra.mxu0 0.0
    %660 = vmatprep.subr.mxu0 0.0
    %661 = vmatpush1.msra.mxu0 0.0
    %662 = vmatprep.subr.mxu0 0.0
    %663 = vmatpush1.msra.mxu0 0.0
    %664 = vmatprep.subr.mxu0 0.0
    %665 = vmatpush1.msra.mxu0 0.0
    %666 = vmatprep.subr.mxu0 0.0
    %667 = vmatpush1.msra.mxu0 0.0
    %668 = vmatprep.subr.mxu0 0.0
    %669 = vmatpush1.msra.mxu0 0.0
    %670 = vmatprep.subr.mxu0 0.0
    %671 = vmatpush1.msra.mxu0 0.0
    %672 = vmatprep.subr.mxu0 0.0
    %673 = vmatpush1.msra.mxu0 0.0
    %674 = vmatprep.subr.mxu0 0.0
    %675 = vmatpush1.msra.mxu0 0.0
    %676 = vmatprep.subr.mxu0 0.0
    %677 = vmatpush1.msra.mxu0 0.0
    %678 = vmatprep.subr.mxu0 0.0
    %679 = vmatpush1.msra.mxu0 0.0
    %680 = vmatprep.subr.mxu0 0.0
    %681 = vmatpush1.msra.mxu0 0.0
    %682 = vmatprep.subr.mxu0 0.0
    %683 = vmatpush1.msra.mxu0 0.0
    %684 = vmatprep.subr.mxu0 0.0
    %685 = vmatpush1.msra.mxu0 0.0
    %686 = vmatprep.subr.mxu0 0.0
    %687 = vmatpush1.msra.mxu0 0.0
    %688 = vmatprep.subr.mxu0 0.0
    %689 = vmatpush1.msra.mxu0 0.0
    %690 = vmatprep.subr.mxu0 0.0
    %691 = vmatpush1.msra.mxu0 0.0
    %692 = vmatprep.subr.mxu0 0.0
    %693 = vmatpush1.msra.mxu0 0.0
    %694 = vmatprep.subr.mxu0 0.0
    %695 = vmatpush1.msra.mxu0 0.0
    %696 = vmatprep.subr.mxu0 0.0
    %697 = vmatpush1.msra.mxu0 0.0
    %698 = vmatprep.subr.mxu0 0.0
    %699 = vmatpush1.msra.mxu0 0.0
    %700 = vmatprep.subr.mxu0 0.0
    %701 = vmatpush1.msra.mxu0 0.0
    %702 = vmatprep.subr.mxu0 0.0
    %703 = vmatpush1.msra.mxu0 0.0
    %704 = vmatprep.subr.mxu0 0.0
    %705 = vmatpush1.msra.mxu0 0.0
    %706 = vmatprep.subr.mxu0 0.0
    %707 = vmatpush1.msra.mxu0 0.0
    %708 = vmatprep.subr.mxu0 0.0
    %709 = vmatpush1.msra.mxu0 0.0
    %710 = vmatprep.subr.mxu0 0.0
    %711 = vmatpush1.msra.mxu0 0.0
    %712 = vmatprep.subr.mxu0 0.0
    %713 = vmatpush1.msra.mxu0 0.0
    %714 = vmatprep.mubr.f32.mxu0 0.0
    %715 = vmatmul.mubr.f32.gmra.mrb[0].mxu0 %v323
    %v716 = vpop.f32.mrb[0].mxu0
    %v717 = vadd.f32 %v320, %v716
    %v718 = vpop.f32.mrb[0].mxu0
    %719 = vdwg.mxu0
    %v720 = vadd.f32 %v406, %v717
    %s721 = scalar_lea.vmem [#allocation6], 1
    %v722 = vld [vmem:[%s721] sm:$0x1]
    %v724 = vlaneseq
    %v725 = vshrl.u32 %v724, 7
    %v726 = vsub.s32 0, %v725
    %v727 = vrot.slane %v722, %v726
    %v729 = vmul.f32 %v720, %v727
    %s730 = scalar_lea.vmem [#allocation8], 8
    %731 = vst [vmem:[%s730] sm:$0xff] %v729
    // Predicated region
    $region38: #{tpu_custom_call.1} parent=1 // pred_check
      _
    $region39: #{tpu_custom_call.1} parent=1 // pred_check_branch
      %733 = sbr.rel (0) target = $region41
    $region40: #{tpu_custom_call.1} parent=1 // pred_region
      %s735 = ssub.s32 256, 256
      %736 = vsyncadd [#allocation5], %s735
      %s737 = sshll.u32 [#allocation8], 4
      %s738 = int_to_ptr.vmem [resolvable:$true] %s737
      %743 = dma.vmem_to_hbm [thread:$0]  %s738, 256, %s6, [#allocation5], 128, 128, 8
    $region41: #{tpu_custom_call.1} parent=1 // pred_fallthru
      _
    // Predicated region
    $region42: #{tpu_custom_call.1} parent=1 // pred_check
      _
    $region43: #{tpu_custom_call.1} parent=1 // pred_check_branch
      %745 = sbr.rel (0) target = $region45
    $region44: #{tpu_custom_call.1} parent=1 // pred_region
      %746 = dma.done [#allocation5], 256
    $region45: #{tpu_custom_call.1} parent=1 // pred_fallthru
      _
    %747 = vsyncpa [#allocation4], 1
    %748 = vsyncpa [#allocation7], 1
    %749 = vsyncpa [#allocation5], 1

</llo_original>
